<compile_context>
chip_gen: v6e
topology: v6e:2x2x1
jax: 0.10.0
libtpu: 0.0.40
codegen_flags: <defaults>
</compile_context>

<pallas_src>
import functools

import jax
import jax.numpy as jnp
from jax.experimental import pallas as pl
from jax.experimental.pallas import tpu as pltpu


_VMEM_BUDGET_BYTES = 32 * 1024 * 1024   # sizing budget (safe on every TPU gen)
_VMEM_LIMIT_BYTES = 48 * 1024 * 1024    # scoped limit handed to Mosaic


def _mlp_kernel(x_ref, w1_ref, b1_ref, w2_ref, b2_ref, o_ref):
    """relu(relu(x @ W1 + b1) @ W2 + b2) on one (rows, 2H) tile."""
    h = jnp.dot(x_ref[...], w1_ref[...], preferred_element_type=jnp.float32)
    h = jnp.maximum(h + b1_ref[...], 0.0)
    y = jnp.dot(h, w2_ref[...], preferred_element_type=jnp.float32)
    o_ref[...] = jnp.maximum(y + b2_ref[...], 0.0).astype(o_ref.dtype)


def _choose_row_tile(n_rows, f_in, f_out):
    """Largest row tile that fits the VMEM budget (multiple of 8).

    Accounts for double-buffered activations/outputs and the double-buffered
    resident weights.  When the batch is large, caps the tile so the grid has
    >= 2 steps — both v7x TensorCores get work; harmless on 1-TC chips.
    """
    weight_bytes = 2 * 4 * (f_in * f_in + f_in + f_in * f_out + f_out)
    avail = max(_VMEM_BUDGET_BYTES - weight_bytes, 4 * 1024 * 1024)
    per_row = 4 * (3 * f_in + 3 * f_out)          # x (x2) + h + out (x2), f32
    tile = min(max(avail // per_row, 8), 1024)
    if n_rows >= 128:
        half = -(-n_rows // 2)
        tile = min(tile, -(-half // 8) * 8)       # round_up(ceil(n/2), 8)
    tile = max((tile // 8) * 8, 8)
    if tile >= n_rows:
        return n_rows        # single full block: no (8, .) divisibility needed
    return tile


def _mlp_pallas(x, w1, b1, w2, b2):
    rows, f_in = x.shape
    f_out = w2.shape[1]
    tile = _choose_row_tile(rows, f_in, f_out)
    grid = (pl.cdiv(rows, tile),)

    rep = lambda shape: pl.BlockSpec(shape, lambda i: (0, 0))   # VMEM-resident

    return pl.pallas_call(
        _mlp_kernel,
        out_shape=jax.ShapeDtypeStruct((rows, f_out), x.dtype),
        grid=grid,
        in_specs=[
            pl.BlockSpec((tile, f_in), lambda i: (i, 0)),   # stacked activations
            rep((f_in, f_in)),                              # fc11 weight (in, out)
            rep((1, f_in)),                                 # fc11 bias
            rep((f_in, f_out)),                             # fc12 weight (in, out)
            rep((1, f_out)),                                # fc12 bias
        ],
        out_specs=pl.BlockSpec((tile, f_out), lambda i: (i, 0)),
        compiler_params=pltpu.CompilerParams(
            dimension_semantics=("parallel",),
            vmem_limit_bytes=_VMEM_LIMIT_BYTES),
    )(x, w1, b1, w2, b2)


def _mlp_xla(x, w1, b1, w2, b2):
    h = jnp.maximum(jnp.dot(x, w1) + b1, 0.0)
    return jnp.maximum(jnp.dot(h, w2) + b2, 0.0)


@functools.partial(jax.jit, static_argnames=("use_pallas",))
def combine_forward(hn_1, cn_1, hn_2, cn_2, w11, b11, w12, b12, *,
                    use_pallas=None):
    """Forward pass of `Combine`.  Returns (hn, cn).

    Feature concat and hn/cn row-stacking happen here (cheap, fused XLA ops);
    the Pallas kernel then runs the shared two-layer MLP ONCE on a single
    (2B, 2H) operand with VMEM-resident weights.
    """
    B = hn_1.shape[0]
    x = jnp.concatenate(
        [jnp.concatenate([hn_1, hn_2], axis=-1),
         jnp.concatenate([cn_1, cn_2], axis=-1)], axis=0)        # (2B, 2H)
    rows, f_in = x.shape
    if use_pallas is None:
        # Tiny problems: custom-call + grid-step overhead dominates; let XLA
        # fuse the two GEMMs instead.
        use_pallas = rows * f_in >= 128 * 128
    y = (_mlp_pallas(x, w11, b11, w12, b12) if use_pallas
         else _mlp_xla(x, w11, b11, w12, b12))
    return y[:B], y[B:]


def init_params(key, hidden_size, output_size, dtype=jnp.float32):
    """PyTorch-style uniform(-1/sqrt(fan_in), 1/sqrt(fan_in)) init.

    Weights are stored transposed as (in_features, out_features) so the kernel
    computes y = x @ W + b on the MXU.  fc21 / fc22 are unused in forward and
    are not materialized.
    """
    H2 = hidden_size * 2

    def linear(k, fan_in, fan_out):
        kw, kb = jax.random.split(k)
        bound = 1.0 / float(fan_in) ** 0.5
        w = jax.random.uniform(kw, (fan_in, fan_out), dtype, -bound, bound)
        b = jax.random.uniform(kb, (1, fan_out), dtype, -bound, bound)
        return w, b

    k11, k12 = jax.random.split(key, 2)
    w11, b11 = linear(k11, H2, H2)              # fc11
    w12, b12 = linear(k12, H2, output_size)     # fc12
    return w11, b11, w12, b12


def _reference(hn_1, cn_1, hn_2, cn_2, w1, b1, w2, b2):
    hi = jax.lax.Precision.HIGHEST

    def mlp(z):
        h = jnp.maximum(jnp.dot(z, w1, precision=hi) + b1, 0.0)
        return jnp.maximum(jnp.dot(h, w2, precision=hi) + b2, 0.0)

    return (mlp(jnp.concatenate([hn_1, hn_2], axis=-1)),
            mlp(jnp.concatenate([cn_1, cn_2], axis=-1)))


if __name__ == "__main__":
    # --- Small config at module-implied sizes; force the Pallas path --------
    hidden_size, output_size, batch = 32, 64, 16
    kp, k1, k2, k3, k4 = jax.random.split(jax.random.PRNGKey(0), 5)
    w11, b11, w12, b12 = init_params(kp, hidden_size, output_size)
    hn_1 = jax.random.normal(k1, (batch, hidden_size), jnp.float32)
    cn_1 = jax.random.normal(k2, (batch, hidden_size), jnp.float32)
    hn_2 = jax.random.normal(k3, (batch, hidden_size), jnp.float32)
    cn_2 = jax.random.normal(k4, (batch, hidden_size), jnp.float32)

    hn_out, cn_out = combine_forward(hn_1, cn_1, hn_2, cn_2,
                                     w11, b11, w12, b12, use_pallas=True)
    jax.block_until_ready((hn_out, cn_out))
    hn_ref, cn_ref = _reference(hn_1, cn_1, hn_2, cn_2, w11, b11, w12, b12)
    assert jnp.allclose(hn_out, hn_ref, atol=1e-5), "hn mismatch (small)"
    assert jnp.allclose(cn_out, cn_ref, atol=1e-5), "cn mismatch (small)"

    # --- Larger config: exercises the tiled, multi-step "parallel" grid -----
    hidden_size, output_size, batch = 128, 96, 200
    kp, k1, k2, k3, k4 = jax.random.split(jax.random.PRNGKey(1), 5)
    w11, b11, w12, b12 = init_params(kp, hidden_size, output_size)
    hn_1 = jax.random.normal(k1, (batch, hidden_size), jnp.float32)
    cn_1 = jax.random.normal(k2, (batch, hidden_size), jnp.float32)
    hn_2 = jax.random.normal(k3, (batch, hidden_size), jnp.float32)
    cn_2 = jax.random.normal(k4, (batch, hidden_size), jnp.float32)

    hn_out, cn_out = combine_forward(hn_1, cn_1, hn_2, cn_2,
                                     w11, b11, w12, b12)   # auto -> Pallas path
    jax.block_until_ready((hn_out, cn_out))
    hn_ref, cn_ref = _reference(hn_1, cn_1, hn_2, cn_2, w11, b11, w12, b12)
    assert jnp.allclose(hn_out, hn_ref, atol=2e-4, rtol=2e-4), "hn mismatch (large)"
    assert jnp.allclose(cn_out, cn_ref, atol=2e-4, rtol=2e-4), "cn mismatch (large)"

    print("KERNEL_OK")
</pallas_src>

<mosaic_0001>
module attributes {stable_mosaic.version = 11 : i64} {
  func.func @_mlp_kernel(%arg0: i32, %arg1: memref<32x64xf32, #tpu.memory_space<vmem>>, %arg2: memref<64x64xf32, #tpu.memory_space<vmem>>, %arg3: memref<1x64xf32, #tpu.memory_space<vmem>>, %arg4: memref<64x64xf32, #tpu.memory_space<vmem>>, %arg5: memref<1x64xf32, #tpu.memory_space<vmem>>, %arg6: memref<32x64xf32, #tpu.memory_space<vmem>>) attributes {dimension_semantics = [#tpu.dimension_semantics<parallel>], iteration_bounds = array<i64: 1>, scalar_prefetch = 0 : i64, scratch_operands = 0 : i64, tpu.core_type = #tpu.core_type<tc>, window_params = [{transform_indices = @transform_0, window_bounds = array<i64: 32, 64>}, {pipeline_mode = #tpu.pipeline_mode<synchronous>, transform_indices = @transform_1, window_bounds = array<i64: 64, 64>}, {pipeline_mode = #tpu.pipeline_mode<synchronous>, transform_indices = @transform_2, window_bounds = array<i64: 1, 64>}, {pipeline_mode = #tpu.pipeline_mode<synchronous>, transform_indices = @transform_3, window_bounds = array<i64: 64, 64>}, {pipeline_mode = #tpu.pipeline_mode<synchronous>, transform_indices = @transform_4, window_bounds = array<i64: 1, 64>}, {transform_indices = @transform_5, window_bounds = array<i64: 32, 64>}]} {
    %c0 = arith.constant 0 : index
    %c0_0 = arith.constant 0 : index
    %0 = vector.load %arg1[%c0, %c0_0] : memref<32x64xf32, #tpu.memory_space<vmem>>, vector<32x64xf32>
    %c0_1 = arith.constant 0 : index
    %c0_2 = arith.constant 0 : index
    %1 = vector.load %arg2[%c0_1, %c0_2] : memref<64x64xf32, #tpu.memory_space<vmem>>, vector<64x64xf32>
    %cst = arith.constant dense<0.000000e+00> : vector<32x64xf32>
    %2 = tpu.matmul %0, %1, %cst {dimension_numbers = #tpu.dot_dimension_numbers<[1], [0], [0], [1], [0, 0, 1, 1], [], []>} : vector<32x64xf32>, vector<64x64xf32>, vector<32x64xf32> -> vector<32x64xf32>
    %c0_3 = arith.constant 0 : index
    %c0_4 = arith.constant 0 : index
    %3 = vector.load %arg3[%c0_3, %c0_4] : memref<1x64xf32, #tpu.memory_space<vmem>>, vector<1x64xf32>
    %4 = vector.broadcast %3 : vector<1x64xf32> to vector<32x64xf32>
    %5 = arith.addf %2, %4 : vector<32x64xf32>
    %cst_5 = arith.constant 0.000000e+00 : f32
    %6 = vector.broadcast %cst_5 : f32 to vector<32x64xf32>
    %7 = arith.maximumf %5, %6 : vector<32x64xf32>
    %c0_6 = arith.constant 0 : index
    %c0_7 = arith.constant 0 : index
    %8 = vector.load %arg4[%c0_6, %c0_7] : memref<64x64xf32, #tpu.memory_space<vmem>>, vector<64x64xf32>
    %cst_8 = arith.constant dense<0.000000e+00> : vector<32x64xf32>
    %9 = tpu.matmul %7, %8, %cst_8 {dimension_numbers = #tpu.dot_dimension_numbers<[1], [0], [0], [1], [0, 0, 1, 1], [], []>} : vector<32x64xf32>, vector<64x64xf32>, vector<32x64xf32> -> vector<32x64xf32>
    %c0_9 = arith.constant 0 : index
    %c0_10 = arith.constant 0 : index
    %10 = vector.load %arg5[%c0_9, %c0_10] : memref<1x64xf32, #tpu.memory_space<vmem>>, vector<1x64xf32>
    %11 = vector.broadcast %10 : vector<1x64xf32> to vector<32x64xf32>
    %12 = arith.addf %9, %11 : vector<32x64xf32>
    %cst_11 = arith.constant 0.000000e+00 : f32
    %13 = vector.broadcast %cst_11 : f32 to vector<32x64xf32>
    %14 = arith.maximumf %12, %13 : vector<32x64xf32>
    %c0_12 = arith.constant 0 : index
    %c0_13 = arith.constant 0 : index
    %15 = vector.load %arg6[%c0_12, %c0_13] : memref<32x64xf32, #tpu.memory_space<vmem>>, vector<32x64xf32>
    tpu.vector_store %arg6[%c0_12, %c0_13], %14 {strides = array<i32>} : memref<32x64xf32, #tpu.memory_space<vmem>>, vector<32x64xf32>,
    return
  }
  func.func @transform_0(%arg0: i32) -> (i32, i32) {
    %c0_i32 = arith.constant 0 : i32
    %c0_i32_0 = arith.constant 0 : i32
    return %arg0, %c0_i32 : i32, i32
  }
  func.func @transform_1(%arg0: i32) -> (i32, i32) {
    %c0_i32 = arith.constant 0 : i32
    %c0_i32_0 = arith.constant 0 : i32
    %c0_i32_1 = arith.constant 0 : i32
    return %c0_i32, %c0_i32_0 : i32, i32
  }
  func.func @transform_2(%arg0: i32) -> (i32, i32) {
    %c0_i32 = arith.constant 0 : i32
    %c0_i32_0 = arith.constant 0 : i32
    %c0_i32_1 = arith.constant 0 : i32
    return %c0_i32, %c0_i32_0 : i32, i32
  }
  func.func @transform_3(%arg0: i32) -> (i32, i32) {
    %c0_i32 = arith.constant 0 : i32
    %c0_i32_0 = arith.constant 0 : i32
    %c0_i32_1 = arith.constant 0 : i32
    return %c0_i32, %c0_i32_0 : i32, i32
  }
  func.func @transform_4(%arg0: i32) -> (i32, i32) {
    %c0_i32 = arith.constant 0 : i32
    %c0_i32_0 = arith.constant 0 : i32
    %c0_i32_1 = arith.constant 0 : i32
    return %c0_i32, %c0_i32_0 : i32, i32
  }
  func.func @transform_5(%arg0: i32) -> (i32, i32) {
    %c0_i32 = arith.constant 0 : i32
    %c0_i32_0 = arith.constant 0 : i32
    return %arg0, %c0_i32 : i32, i32
  }
}

</mosaic_0001>

<llo_original>
// kernel: combine_forward.1
$region0: #{combine_forward.1}
  #allocation0 [shape = 'u32[]', space=smem, size = 0x4, offset = 0x4, fixed_abs, tag = 'smem constant byte address 0x4 - core index']
  #allocation1 [shape = 'u32[144,128]{1,0:T(1,128)}', space=vmem, size = 0x12000, scoped, tag = 'internal scratch']
  %s0 = inlined_call_operand.vmem [shape: f32[32,64], index: 0, kind: input, shape index: {}]
  %s1 = inlined_call_operand.vmem [shape: f32[64,64], index: 1, kind: input, shape index: {}]
  %s2 = inlined_call_operand.vmem [shape: f32[1,64], index: 2, kind: input, shape index: {}]
  %s3 = inlined_call_operand.hbm [shape: f32[64,64], index: 3, kind: input, shape index: {}]
  %s4 = inlined_call_operand.vmem [shape: f32[1,64], index: 4, kind: input, shape index: {}]
  %s5 = inlined_call_operand.vmem [shape: f32[32,64], index: 5, kind: output, shape index: {}]
  %s6 = sld [smem:[#allocation0]]
  $region34: #{combine_forward.1} parent=0
    _
  %s8 = ssub.s32 1, %s6
  %s9 = scalar_select 0, %s8, %s6
  $region1: #{combine_forward.1} parent=0
    #allocation2 [shape = 'u8[32768]{0}', space=vmem, size = 0x8000, scoped, tag = 'input window, operand 3, single buffered']
    #allocation3 [shape = 's32[1]{0}', space=sflag, size = 0x4, scoped, tag = 'scoped memory for combine_forward.1']
    %10 = vsyncpa [#allocation3], 0
    // Predicated region
    $region2: #{combine_forward.1} parent=1 // pred_check
      _
    $region3: #{combine_forward.1} parent=1 // pred_check_branch
      %12 = sbr.rel (0) target = $region5
    $region4: #{combine_forward.1} parent=1 // pred_region
      _
    $region5: #{combine_forward.1} parent=1 // pred_fallthru
      _
    // Predicated region
    $region6: #{combine_forward.1} parent=1 // pred_check
      _
    $region7: #{combine_forward.1} parent=1 // pred_check_branch
      %14 = sbr.rel (0) target = $region9
    $region8: #{combine_forward.1} parent=1 // pred_region
      _
    $region9: #{combine_forward.1} parent=1 // pred_fallthru
      _
    // Predicated region
    $region10: #{combine_forward.1} parent=1 // pred_check
      _
    $region11: #{combine_forward.1} parent=1 // pred_check_branch
      %16 = sbr.rel (0) target = $region13
    $region12: #{combine_forward.1} parent=1 // pred_region
      _
    $region13: #{combine_forward.1} parent=1 // pred_fallthru
      _
    // Predicated region
    $region14: #{combine_forward.1} parent=1 // pred_check
      _
    $region15: #{combine_forward.1} parent=1 // pred_check_branch
      %18 = sbr.rel (0) target = $region17
    $region16: #{combine_forward.1} parent=1 // pred_region
      %s20 = ssub.s32 1024, 1024
      %21 = vsyncadd [#allocation3], %s20
      %s22 = sshll.u32 [#allocation2], 4
      %s23 = int_to_ptr.vmem [resolvable:$true] %s22
      %28 = dma.hbm_to_vmem [thread:$0]  %s3, 1024, %s23, [#allocation3], 128, 128, 8
    $region17: #{combine_forward.1} parent=1 // pred_fallthru
      _
    // Predicated region
    $region18: #{combine_forward.1} parent=1 // pred_check
      _
    $region19: #{combine_forward.1} parent=1 // pred_check_branch
      %30 = sbr.rel (0) target = $region21
    $region20: #{combine_forward.1} parent=1 // pred_region
      _
    $region21: #{combine_forward.1} parent=1 // pred_fallthru
      _
    // Predicated region
    $region22: #{combine_forward.1} parent=1 // pred_check
      _
    $region23: #{combine_forward.1} parent=1 // pred_check_branch
      %32 = sbr.rel (0) target = $region25
    $region24: #{combine_forward.1} parent=1 // pred_region
      %33 = dma.done [#allocation3], 1024
    $region25: #{combine_forward.1} parent=1 // pred_fallthru
      _
    %v34 = vld [vmem:[%s0] sm:$0xff]
    %v35 = vld [vmem:[%s0 + $0x8] sm:$0xff]
    %v36 = vld [vmem:[%s0 + $0x10] sm:$0xff]
    %v37 = vld [vmem:[%s0 + $0x18] sm:$0xff]
    %v38 = vld [vmem:[%s1] sm:$0xff]
    %v39 = vld [vmem:[%s1 + $0x8] sm:$0xff]
    %v40 = vld [vmem:[%s1 + $0x10] sm:$0xff]
    %v41 = vld [vmem:[%s1 + $0x18] sm:$0xff]
    %v42 = vld [vmem:[%s1 + $0x20] sm:$0xff]
    %v43 = vld [vmem:[%s1 + $0x28] sm:$0xff]
    %v44 = vld [vmem:[%s1 + $0x30] sm:$0xff]
    %v45 = vld [vmem:[%s1 + $0x38] sm:$0xff]
    %v46 = vld [vmem:[%s2] sm:$0x1]
    %v48 = vlaneseq
    %v49 = vshrl.u32 %v48, 7
    %v50 = vsub.s32 0, %v49
    %v51 = vrot.slane %v46, %v50
    %vm53 = vcmask 523264
    %v55 = vsel %vm53, %v34, 0
    %v58 = vsel %vm53, %v35, 0
    %v61 = vsel %vm53, %v36, 0
    %v64 = vsel %vm53, %v37, 0
    %66 = vmatprep.subr.mxu0 0.0
    %67 = vmatpush1.msra.mxu0 0.0
    %68 = vmatprep.subr.mxu0 0.0
    %69 = vmatpush1.msra.mxu0 0.0
    %70 = vmatprep.subr.mxu0 0.0
    %71 = vmatpush1.msra.mxu0 0.0
    %72 = vmatprep.subr.mxu0 0.0
    %73 = vmatpush1.msra.mxu0 0.0
    %74 = vmatprep.subr.mxu0 0.0
    %75 = vmatpush1.msra.mxu0 0.0
    %76 = vmatprep.subr.mxu0 0.0
    %77 = vmatpush1.msra.mxu0 0.0
    %78 = vmatprep.subr.mxu0 0.0
    %79 = vmatpush1.msra.mxu0 0.0
    %80 = vmatprep.subr.mxu0 0.0
    %81 = vmatpush1.msra.mxu0 0.0
    %82 = vmatprep.subr.mxu0 0.0
    %83 = vmatpush1.msra.mxu0 %v45
    %84 = vmatprep.subr.mxu0 0.0
    %85 = vmatpush1.msra.mxu0 %v44
    %86 = vmatprep.subr.mxu0 0.0
    %87 = vmatpush1.msra.mxu0 %v43
    %88 = vmatprep.subr.mxu0 0.0
    %89 = vmatpush1.msra.mxu0 %v42
    %90 = vmatprep.subr.mxu0 0.0
    %91 = vmatpush1.msra.mxu0 %v41
    %92 = vmatprep.subr.mxu0 0.0
    %93 = vmatpush1.msra.mxu0 %v40
    %94 = vmatprep.subr.mxu0 0.0
    %95 = vmatpush1.msra.mxu0 %v39
    %96 = vmatprep.subr.mxu0 0.0
    %97 = vmatpush1.msra.mxu0 %v38
    %98 = vmatprep.subr.mxu0 0.0
    %99 = vmatpush2.msra.mxu0 0.0
    %100 = vmatprep.subr.mxu0 0.0
    %101 = vmatpush2.msra.mxu0 0.0
    %102 = vmatprep.subr.mxu0 0.0
    %103 = vmatpush2.msra.mxu0 0.0
    %104 = vmatprep.subr.mxu0 0.0
    %105 = vmatpush2.msra.mxu0 0.0
    %106 = vmatprep.subr.mxu0 0.0
    %107 = vmatpush2.msra.mxu0 0.0
    %108 = vmatprep.subr.mxu0 0.0
    %109 = vmatpush2.msra.mxu0 0.0
    %110 = vmatprep.subr.mxu0 0.0
    %111 = vmatpush2.msra.mxu0 0.0
    %112 = vmatprep.subr.mxu0 0.0
    %113 = vmatpush2.msra.mxu0 0.0
    %114 = vmatprep.subr.mxu0 0.0
    %115 = vmatpush2.msra.mxu0 0.0
    %116 = vmatprep.subr.mxu0 0.0
    %117 = vmatpush2.msra.mxu0 0.0
    %118 = vmatprep.subr.mxu0 0.0
    %119 = vmatpush2.msra.mxu0 0.0
    %120 = vmatprep.subr.mxu0 0.0
    %121 = vmatpush2.msra.mxu0 0.0
    %122 = vmatprep.subr.mxu0 0.0
    %123 = vmatpush2.msra.mxu0 0.0
    %124 = vmatprep.subr.mxu0 0.0
    %125 = vmatpush2.msra.mxu0 0.0
    %126 = vmatprep.subr.mxu0 0.0
    %127 = vmatpush2.msra.mxu0 0.0
    %128 = vmatprep.subr.mxu0 0.0
    %129 = vmatpush2.msra.mxu0 0.0
    %130 = vmatprep.mubr.f32.mxu0 0.0
    %131 = vmatmul.mubr.f32.gmra.mxu0 %v55
    %v132 = vpop.f32.mrf.mxu0
    %v133 = vadd.f32 %v51, %v132
    %v134 = vpop.f32.mrf.mxu0
    %135 = vmatprep.mubr.f32.mxu0 0.0
    %136 = vmatmul.mubr.f32.gmra.mxu0 %v58
    %v137 = vpop.f32.mrf.mxu0
    %v138 = vadd.f32 %v51, %v137
    %v139 = vpop.f32.mrf.mxu0
    %140 = vmatprep.mubr.f32.mxu0 0.0
    %141 = vmatmul.mubr.f32.gmra.mxu0 %v61
    %v142 = vpop.f32.mrf.mxu0
    %v143 = vadd.f32 %v51, %v142
    %v144 = vpop.f32.mrf.mxu0
    %145 = vmatprep.mubr.f32.mxu0 0.0
    %146 = vmatmul.mubr.f32.gmra.mxu0 %v64
    %v147 = vpop.f32.mrf.mxu0
    %v148 = vadd.f32 %v51, %v147
    %v149 = vpop.f32.mrf.mxu0
    %150 = vdwg.mxu0
    %v151 = vmax.f32 %v133, 0.0
    %v152 = vmax.f32 %v138, 0.0
    %v153 = vmax.f32 %v143, 0.0
    %v154 = vmax.f32 %v148, 0.0
    %v155 = vld [vmem:[#allocation2] sm:$0xff]
    %v156 = vld [vmem:[#allocation2 + $0x8] sm:$0xff]
    %v157 = vld [vmem:[#allocation2 + $0x10] sm:$0xff]
    %v158 = vld [vmem:[#allocation2 + $0x18] sm:$0xff]
    %v159 = vld [vmem:[#allocation2 + $0x20] sm:$0xff]
    %v160 = vld [vmem:[#allocation2 + $0x28] sm:$0xff]
    %v161 = vld [vmem:[#allocation2 + $0x30] sm:$0xff]
    %v162 = vld [vmem:[#allocation2 + $0x38] sm:$0xff]
    %v163 = vld [vmem:[%s4] sm:$0x1]
    %v165 = vlaneseq
    %v166 = vshrl.u32 %v165, 7
    %v167 = vsub.s32 0, %v166
    %v168 = vrot.slane %v163, %v167
    %v171 = vsel %vm53, %v151, 0
    %v174 = vsel %vm53, %v152, 0
    %v177 = vsel %vm53, %v153, 0
    %v180 = vsel %vm53, %v154, 0
    %182 = vmatprep.subr.mxu0 0.0
    %183 = vmatpush1.msra.mxu0 0.0
    %184 = vmatprep.subr.mxu0 0.0
    %185 = vmatpush1.msra.mxu0 0.0
    %186 = vmatprep.subr.mxu0 0.0
    %187 = vmatpush1.msra.mxu0 0.0
    %188 = vmatprep.subr.mxu0 0.0
    %189 = vmatpush1.msra.mxu0 0.0
    %190 = vmatprep.subr.mxu0 0.0
    %191 = vmatpush1.msra.mxu0 0.0
    %192 = vmatprep.subr.mxu0 0.0
    %193 = vmatpush1.msra.mxu0 0.0
    %194 = vmatprep.subr.mxu0 0.0
    %195 = vmatpush1.msra.mxu0 0.0
    %196 = vmatprep.subr.mxu0 0.0
    %197 = vmatpush1.msra.mxu0 0.0
    %198 = vmatprep.subr.mxu0 0.0
    %199 = vmatpush1.msra.mxu0 %v162
    %200 = vmatprep.subr.mxu0 0.0
    %201 = vmatpush1.msra.mxu0 %v161
    %202 = vmatprep.subr.mxu0 0.0
    %203 = vmatpush1.msra.mxu0 %v160
    %204 = vmatprep.subr.mxu0 0.0
    %205 = vmatpush1.msra.mxu0 %v159
    %206 = vmatprep.subr.mxu0 0.0
    %207 = vmatpush1.msra.mxu0 %v158
    %208 = vmatprep.subr.mxu0 0.0
    %209 = vmatpush1.msra.mxu0 %v157
    %210 = vmatprep.subr.mxu0 0.0
    %211 = vmatpush1.msra.mxu0 %v156
    %212 = vmatprep.subr.mxu0 0.0
    %213 = vmatpush1.msra.mxu0 %v155
    %214 = vmatprep.subr.mxu0 0.0
    %215 = vmatpush2.msra.mxu0 0.0
    %216 = vmatprep.subr.mxu0 0.0
    %217 = vmatpush2.msra.mxu0 0.0
    %218 = vmatprep.subr.mxu0 0.0
    %219 = vmatpush2.msra.mxu0 0.0
    %220 = vmatprep.subr.mxu0 0.0
    %221 = vmatpush2.msra.mxu0 0.0
    %222 = vmatprep.subr.mxu0 0.0
    %223 = vmatpush2.msra.mxu0 0.0
    %224 = vmatprep.subr.mxu0 0.0
    %225 = vmatpush2.msra.mxu0 0.0
    %226 = vmatprep.subr.mxu0 0.0
    %227 = vmatpush2.msra.mxu0 0.0
    %228 = vmatprep.subr.mxu0 0.0
    %229 = vmatpush2.msra.mxu0 0.0
    %230 = vmatprep.subr.mxu0 0.0
    %231 = vmatpush2.msra.mxu0 0.0
    %232 = vmatprep.subr.mxu0 0.0
    %233 = vmatpush2.msra.mxu0 0.0
    %234 = vmatprep.subr.mxu0 0.0
    %235 = vmatpush2.msra.mxu0 0.0
    %236 = vmatprep.subr.mxu0 0.0
    %237 = vmatpush2.msra.mxu0 0.0
    %238 = vmatprep.subr.mxu0 0.0
    %239 = vmatpush2.msra.mxu0 0.0
    %240 = vmatprep.subr.mxu0 0.0
    %241 = vmatpush2.msra.mxu0 0.0
    %242 = vmatprep.subr.mxu0 0.0
    %243 = vmatpush2.msra.mxu0 0.0
    %244 = vmatprep.subr.mxu0 0.0
    %245 = vmatpush2.msra.mxu0 0.0
    %246 = vmatprep.mubr.f32.mxu0 0.0
    %247 = vmatmul.mubr.f32.gmra.mxu0 %v171
    %v248 = vpop.f32.mrf.mxu0
    %v249 = vadd.f32 %v168, %v248
    %v250 = vpop.f32.mrf.mxu0
    %251 = vmatprep.mubr.f32.mxu0 0.0
    %252 = vmatmul.mubr.f32.gmra.mxu0 %v174
    %v253 = vpop.f32.mrf.mxu0
    %v254 = vadd.f32 %v168, %v253
    %v255 = vpop.f32.mrf.mxu0
    %256 = vmatprep.mubr.f32.mxu0 0.0
    %257 = vmatmul.mubr.f32.gmra.mxu0 %v177
    %v258 = vpop.f32.mrf.mxu0
    %v259 = vadd.f32 %v168, %v258
    %v260 = vpop.f32.mrf.mxu0
    %261 = vmatprep.mubr.f32.mxu0 0.0
    %262 = vmatmul.mubr.f32.gmra.mxu0 %v180
    %v263 = vpop.f32.mrf.mxu0
    %v264 = vadd.f32 %v168, %v263
    %v265 = vpop.f32.mrf.mxu0
    %266 = vdwg.mxu0
    %v267 = vmax.f32 %v249, 0.0
    %v268 = vmax.f32 %v254, 0.0
    %v269 = vmax.f32 %v259, 0.0
    %v270 = vmax.f32 %v264, 0.0
    %271 = vst.msk [vmem:[%s5] sm:$0xff] %vm53, %v267
    %272 = vst.msk [vmem:[%s5 + $0x8] sm:$0xff] %vm53, %v268
    %273 = vst.msk [vmem:[%s5 + $0x10] sm:$0xff] %vm53, %v269
    %274 = vst.msk [vmem:[%s5 + $0x18] sm:$0xff] %vm53, %v270
    // Predicated region
    $region26: #{combine_forward.1} parent=1 // pred_check
      _
    $region27: #{combine_forward.1} parent=1 // pred_check_branch
      %276 = sbr.rel (0) target = $region29
    $region28: #{combine_forward.1} parent=1 // pred_region
      _
    $region29: #{combine_forward.1} parent=1 // pred_fallthru
      _
    // Predicated region
    $region30: #{combine_forward.1} parent=1 // pred_check
      _
    $region31: #{combine_forward.1} parent=1 // pred_check_branch
      %278 = sbr.rel (0) target = $region33
    $region32: #{combine_forward.1} parent=1 // pred_region
      _
    $region33: #{combine_forward.1} parent=1 // pred_fallthru
      _
    %279 = vsyncpa [#allocation3], 1

</llo_original>
